<compile_context>
chip_gen: v5e
topology: v5e:2x2
jax: 0.10.0
libtpu: 0.0.40
codegen_flags: <defaults>
</compile_context>

<pallas_src>
import functools

import numpy as np
import jax
import jax.numpy as jnp
from jax import lax
from jax.experimental import pallas as pl
from jax.experimental.pallas import tpu as pltpu


# ---- Lanczos (g = 7, 9 coefficients) as a single rational P(x)/Q(x) -------------
_LANCZOS_G = 7.0
_LANCZOS_COEF = (
    0.99999999999980993,
    676.5203681218851,
    -1259.1392167224028,
    771.32342877765313,
    -176.61502916214059,
    12.507343278686905,
    -0.13857109526572012,
    9.9843695780195716e-6,
    1.5056327351493116e-7,
)
_HALF_LOG_2PI = 0.9189385332046727


def _lanczos_rational_coeffs():
    """Expand c0 + sum_k c_k/(x+k-1) into one rational P(x)/Q(x).

    Q(x) = x(x+1)...(x+7). Both P and Q come out with all-positive
    coefficients, so f32 Horner evaluation at x >= 0.5 has no cancellation.
    Done once in float64 at import time (coefficients highest-degree first).
    """
    c = _LANCZOS_COEF
    den = np.array([1.0])
    for j in range(8):
        den = np.convolve(den, [1.0, float(j)])            # * (x + j)
    num = c[0] * den
    for k in range(1, 9):
        term = np.array([1.0])
        for j in range(8):
            if j != k - 1:
                term = np.convolve(term, [1.0, float(j)])
        num = num + c[k] * np.concatenate(([0.0], term))    # align to degree 8
    return tuple(float(v) for v in num), tuple(float(v) for v in den)


_RAT_NUM, _RAT_DEN = _lanczos_rational_coeffs()


def _lgamma(x):
    # Valid for x >= 0.5; here x = output + 0.5 with non-negative model outputs.
    # TODO(synk): no reflection branch (needs sin) — negative `shape` values unsupported.
    num = jnp.full_like(x, _RAT_NUM[0])
    den = jnp.full_like(x, _RAT_DEN[0])
    for cn, cd in zip(_RAT_NUM[1:], _RAT_DEN[1:]):          # Horner, all-positive coeffs
        num = num * x + cn
        den = den * x + cd
    inv = pl.reciprocal(den, approx=True)                   # EUP rcp (free slot)
    inv = inv * (2.0 - den * inv)                           # one Newton step -> ~f32 exact
    a = num * inv
    t = x + (_LANCZOS_G - 0.5)
    return _HALF_LOG_2PI + (x - 0.5) * jnp.log(t) - t + jnp.log(a)


# ---- Pallas kernel ---------------------------------------------------------------
def _gamma_loss_kernel(o_ref, t_ref, acc_ref, *, bias, row_tile, n_blk, n_cols,
                       rows_valid, cols_valid, flat_valid):
    j = pl.program_id(0)          # column tile ("parallel")
    i = pl.program_id(1)          # row tile    ("arbitrary" reduction axis, innermost)

    @pl.when(i == 0)
    def _():
        acc_ref[...] = jnp.zeros_like(acc_ref)

    x = o_ref[...].astype(jnp.float32)
    t = t_ref[...].astype(jnp.float32) + bias
    shape = x + 0.5
    loss = _lgamma(shape) - (shape - 1.0) * jnp.log(t) + t

    # Zero out padded rows / columns / flat tail (all limits are static Python
    # values, so this block compiles away entirely when no padding was needed).
    need_r = (rows_valid is not None) or (flat_valid is not None)
    need_c = (cols_valid is not None) or (flat_valid is not None)
    if need_r:
        rid = i * row_tile + lax.broadcasted_iota(jnp.int32, (row_tile, n_blk), 0)
    if need_c:
        cid = j * n_blk + lax.broadcasted_iota(jnp.int32, (row_tile, n_blk), 1)
    conds = []
    if rows_valid is not None:
        conds.append(rid < rows_valid)
    if cols_valid is not None:
        conds.append(cid < cols_valid)
    if flat_valid is not None:
        conds.append(rid * n_cols + cid < flat_valid)
    if conds:
        valid = functools.reduce(lambda a, b: a & b, conds)
        loss = jnp.where(valid, loss, 0.0)

    # Partial reduction row_tile -> 8 sublanes with plain VALU vreg adds
    # (full-vreg unmasked accumulator stores); final 8 -> 1 is in the wrapper.
    part = loss[0:8, :]
    for r0 in range(8, row_tile, 8):
        part = part + loss[r0:r0 + 8, :]
    acc_ref[...] += part


# ---- wrapper ---------------------------------------------------------------------
def _round_up(v, m):
    return ((v + m - 1) // m) * m


def _pad2d(x, rows_p, cols_p):
    r, c = x.shape
    if r == rows_p and c == cols_p:
        return x
    return jnp.pad(x, ((0, rows_p - r), (0, cols_p - c)))


def gamma_loss(output, target, *, bias=1e-12, per_neuron=False,
               row_tile=256, lane_tile=512):
    """Pallas implementation of GammaLoss.forward (assumes output >= 0)."""
    lane_tile = max(128, _round_up(lane_tile, 128))

    if per_neuron:
        n = output.shape[-1]
        o2 = output.reshape(-1, n)
        t2 = target.reshape(-1, n)
        rows = o2.shape[0]
        n_pad = _round_up(n, 128)
        n_blk = min(lane_tile, n_pad)
        n_pad = _round_up(n_pad, n_blk)
        cols_valid = n if n_pad != n else None
        flat_valid = None
    else:
        # Lane-dense layout: column identity is irrelevant for a scalar mean.
        total = output.size
        lane = 128
        while lane * 2 <= min(1024, max(128, total)):
            lane *= 2
        rows = pl.cdiv(total, lane)
        o2 = jnp.pad(output.reshape(-1), (0, rows * lane - total)).reshape(rows, lane)
        t2 = jnp.pad(target.reshape(-1), (0, rows * lane - total)).reshape(rows, lane)
        n = lane
        n_pad = lane
        n_blk = min(lane_tile, lane)
        cols_valid = None
        flat_valid = total

    # Row tiling: large tile, pad rows up to it, mask padding in-kernel.
    itemsize = max(o2.dtype.itemsize, t2.dtype.itemsize)
    sub = {4: 8, 2: 16, 1: 32}.get(itemsize, 8)          # sublane granularity per dtype
    row_tile = _round_up(max(row_tile, sub), sub)
    row_tile_eff = min(row_tile, _round_up(rows, sub))
    rows_p = _round_up(rows, row_tile_eff)

    rows_valid = rows if (per_neuron and rows_p != rows) else None
    if not per_neuron and rows_p * n_pad == flat_valid:
        flat_valid = None

    o2 = _pad2d(o2, rows_p, n_pad)
    t2 = _pad2d(t2, rows_p, n_pad)

    grid = (n_pad // n_blk, rows_p // row_tile_eff)

    kernel = functools.partial(
        _gamma_loss_kernel, bias=float(bias), row_tile=row_tile_eff,
        n_blk=n_blk, n_cols=n_pad, rows_valid=rows_valid,
        cols_valid=cols_valid, flat_valid=flat_valid)

    col8 = pl.pallas_call(
        kernel,
        out_shape=jax.ShapeDtypeStruct((8, n_pad), jnp.float32),
        grid_spec=pltpu.PrefetchScalarGridSpec(
            num_scalar_prefetch=0,
            grid=grid,
            in_specs=[
                pl.BlockSpec((row_tile_eff, n_blk), lambda j, i: (i, j)),
                pl.BlockSpec((row_tile_eff, n_blk), lambda j, i: (i, j)),
            ],
            out_specs=pl.BlockSpec((8, n_blk), lambda j, i: (0, j)),
        ),
        compiler_params=pltpu.CompilerParams(
            dimension_semantics=("parallel", "arbitrary"),
            vmem_limit_bytes=32 * 1024 * 1024,
        ),
    )(o2, t2)

    if per_neuron:
        return col8.sum(axis=0)[:n] / rows
    return col8.sum() / output.size


# ---- pure-JAX reference ----------------------------------------------------------
def gamma_loss_ref(output, target, *, bias=1e-12, per_neuron=False):
    target = target + bias
    shape = output + 0.5
    loss = jax.lax.lgamma(shape) - (shape - 1.0) * jnp.log(target) + target
    if not per_neuron:
        return loss.mean()
    return loss.reshape(-1, loss.shape[-1]).mean(axis=0)


if __name__ == "__main__":
    key = jax.random.PRNGKey(0)
    k1, k2 = jax.random.split(key)
    # (batch, time, neurons): view(-1, last) collapses to (8, 32) rows x neurons.
    output = jax.random.uniform(k1, (2, 4, 32), jnp.float32, minval=0.05, maxval=3.0)
    target = jax.random.uniform(k2, (2, 4, 32), jnp.float32, minval=0.0, maxval=5.0)

    loss_scalar = jax.block_until_ready(gamma_loss(output, target, per_neuron=False))
    loss_per_n = jax.block_until_ready(gamma_loss(output, target, per_neuron=True))

    ref_scalar = gamma_loss_ref(output, target, per_neuron=False)
    ref_per_n = gamma_loss_ref(output, target, per_neuron=True)

    assert jnp.allclose(loss_scalar, ref_scalar, atol=2e-4, rtol=2e-4), (
        loss_scalar, ref_scalar)
    assert jnp.allclose(loss_per_n, ref_per_n, atol=2e-4, rtol=2e-4), (
        loss_per_n, ref_per_n)

    print("KERNEL_OK")
</pallas_src>

<mosaic_0001>
module attributes {stable_mosaic.version = 11 : i64} {
  func.func @_gamma_loss_kernel(%arg0: i32, %arg1: i32, %arg2: memref<8x256xf32, #tpu.memory_space<vmem>>, %arg3: memref<8x256xf32, #tpu.memory_space<vmem>>, %arg4: memref<8x256xf32, #tpu.memory_space<vmem>>) attributes {dimension_semantics = [#tpu.dimension_semantics<parallel>, #tpu.dimension_semantics<arbitrary>], iteration_bounds = array<i64: 1, 1>, scalar_prefetch = 0 : i64, scratch_operands = 0 : i64, tpu.core_type = #tpu.core_type<tc>, window_params = [{transform_indices = @transform_0, window_bounds = array<i64: 8, 256>}, {transform_indices = @transform_1, window_bounds = array<i64: 8, 256>}, {transform_indices = @transform_2, window_bounds = array<i64: 8, 256>}]} {
    %c0_i32 = arith.constant 0 : i32
    %0 = arith.cmpi eq, %arg1, %c0_i32 : i32
    %1 = arith.extui %0 : i1 to i32
    %c0_i32_0 = arith.constant 0 : i32
    %2 = arith.cmpi ne, %1, %c0_i32_0 : i32
    scf.if %2 {
      %cst_35 = arith.constant 0.000000e+00 : f32
      %100 = vector.broadcast %cst_35 : f32 to vector<8x256xf32>
      %c0_36 = arith.constant 0 : index
      %c0_37 = arith.constant 0 : index
      %101 = vector.load %arg4[%c0_36, %c0_37] : memref<8x256xf32, #tpu.memory_space<vmem>>, vector<8x256xf32>
      tpu.vector_store %arg4[%c0_36, %c0_37], %100 {strides = array<i32>} : memref<8x256xf32, #tpu.memory_space<vmem>>, vector<8x256xf32>,
    } else {
    }
    %c0 = arith.constant 0 : index
    %c0_1 = arith.constant 0 : index
    %3 = vector.load %arg2[%c0, %c0_1] : memref<8x256xf32, #tpu.memory_space<vmem>>, vector<8x256xf32>
    %c0_2 = arith.constant 0 : index
    %c0_3 = arith.constant 0 : index
    %4 = vector.load %arg3[%c0_2, %c0_3] : memref<8x256xf32, #tpu.memory_space<vmem>>, vector<8x256xf32>
    %cst = arith.constant 9.99999996E-13 : f32
    %5 = vector.broadcast %cst : f32 to vector<8x256xf32>
    %6 = arith.addf %4, %5 : vector<8x256xf32>
    %cst_4 = arith.constant 5.000000e-01 : f32
    %7 = vector.broadcast %cst_4 : f32 to vector<8x256xf32>
    %8 = arith.addf %3, %7 : vector<8x256xf32>
    %cst_5 = arith.constant 1.000000e+00 : f32
    %9 = vector.broadcast %cst_5 : f32 to vector<8x256xf32>
    %cst_6 = arith.constant 1.000000e+00 : f32
    %10 = vector.broadcast %cst_6 : f32 to vector<8x256xf32>
    %11 = arith.mulf %9, %8 : vector<8x256xf32>
    %cst_7 = arith.constant 52.4583321 : f32
    %12 = vector.broadcast %cst_7 : f32 to vector<8x256xf32>
    %13 = arith.addf %11, %12 : vector<8x256xf32>
    %14 = arith.mulf %10, %8 : vector<8x256xf32>
    %cst_8 = arith.constant 2.800000e+01 : f32
    %15 = vector.broadcast %cst_8 : f32 to vector<8x256xf32>
    %16 = arith.addf %14, %15 : vector<8x256xf32>
    %17 = arith.mulf %13, %8 : vector<8x256xf32>
    %cst_9 = arith.constant 1203.83423 : f32
    %18 = vector.broadcast %cst_9 : f32 to vector<8x256xf32>
    %19 = arith.addf %17, %18 : vector<8x256xf32>
    %20 = arith.mulf %16, %8 : vector<8x256xf32>
    %cst_10 = arith.constant 3.220000e+02 : f32
    %21 = vector.broadcast %cst_10 : f32 to vector<8x256xf32>
    %22 = arith.addf %20, %21 : vector<8x256xf32>
    %23 = arith.mulf %19, %8 : vector<8x256xf32>
    %cst_11 = arith.constant 15784.8809 : f32
    %24 = vector.broadcast %cst_11 : f32 to vector<8x256xf32>
    %25 = arith.addf %23, %24 : vector<8x256xf32>
    %26 = arith.mulf %22, %8 : vector<8x256xf32>
    %cst_12 = arith.constant 1.960000e+03 : f32
    %27 = vector.broadcast %cst_12 : f32 to vector<8x256xf32>
    %28 = arith.addf %26, %27 : vector<8x256xf32>
    %29 = arith.mulf %25, %8 : vector<8x256xf32>
    %cst_13 = arith.constant 129347.258 : f32
    %30 = vector.broadcast %cst_13 : f32 to vector<8x256xf32>
    %31 = arith.addf %29, %30 : vector<8x256xf32>
    %32 = arith.mulf %28, %8 : vector<8x256xf32>
    %cst_14 = arith.constant 6.769000e+03 : f32
    %33 = vector.broadcast %cst_14 : f32 to vector<8x256xf32>
    %34 = arith.addf %32, %33 : vector<8x256xf32>
    %35 = arith.mulf %31, %8 : vector<8x256xf32>
    %cst_15 = arith.constant 678289.688 : f32
    %36 = vector.broadcast %cst_15 : f32 to vector<8x256xf32>
    %37 = arith.addf %35, %36 : vector<8x256xf32>
    %38 = arith.mulf %34, %8 : vector<8x256xf32>
    %cst_16 = arith.constant 1.313200e+04 : f32
    %39 = vector.broadcast %cst_16 : f32 to vector<8x256xf32>
    %40 = arith.addf %38, %39 : vector<8x256xf32>
    %41 = arith.mulf %37, %8 : vector<8x256xf32>
    %cst_17 = arith.constant 2222880.5 : f32
    %42 = vector.broadcast %cst_17 : f32 to vector<8x256xf32>
    %43 = arith.addf %41, %42 : vector<8x256xf32>
    %44 = arith.mulf %40, %8 : vector<8x256xf32>
    %cst_18 = arith.constant 1.306800e+04 : f32
    %45 = vector.broadcast %cst_18 : f32 to vector<8x256xf32>
    %46 = arith.addf %44, %45 : vector<8x256xf32>
    %47 = arith.mulf %43, %8 : vector<8x256xf32>
    %cst_19 = arith.constant 0x4A7E0D50 : f32
    %48 = vector.broadcast %cst_19 : f32 to vector<8x256xf32>
    %49 = arith.addf %47, %48 : vector<8x256xf32>
    %50 = arith.mulf %46, %8 : vector<8x256xf32>
    %cst_20 = arith.constant 5.040000e+03 : f32
    %51 = vector.broadcast %cst_20 : f32 to vector<8x256xf32>
    %52 = arith.addf %50, %51 : vector<8x256xf32>
    %53 = arith.mulf %49, %8 : vector<8x256xf32>
    %cst_21 = arith.constant 3409662.75 : f32
    %54 = vector.broadcast %cst_21 : f32 to vector<8x256xf32>
    %55 = arith.addf %53, %54 : vector<8x256xf32>
    %56 = arith.mulf %52, %8 : vector<8x256xf32>
    %cst_22 = arith.constant 0.000000e+00 : f32
    %57 = vector.broadcast %cst_22 : f32 to vector<8x256xf32>
    %58 = arith.addf %56, %57 : vector<8x256xf32>
    %59 = tpu.reciprocal %58 {approx = true} : vector<8x256xf32> -> vector<8x256xf32>
    %60 = arith.mulf %58, %59 : vector<8x256xf32>
    %cst_23 = arith.constant 2.000000e+00 : f32
    %61 = vector.broadcast %cst_23 : f32 to vector<8x256xf32>
    %62 = arith.subf %61, %60 : vector<8x256xf32>
    %63 = arith.mulf %59, %62 : vector<8x256xf32>
    %64 = arith.mulf %55, %63 : vector<8x256xf32>
    %cst_24 = arith.constant 6.500000e+00 : f32
    %65 = vector.broadcast %cst_24 : f32 to vector<8x256xf32>
    %66 = arith.addf %8, %65 : vector<8x256xf32>
    %cst_25 = arith.constant 5.000000e-01 : f32
    %67 = vector.broadcast %cst_25 : f32 to vector<8x256xf32>
    %68 = arith.subf %8, %67 : vector<8x256xf32>
    %69 = math.log %66 : vector<8x256xf32>
    %70 = arith.mulf %68, %69 : vector<8x256xf32>
    %cst_26 = arith.constant 0.918938517 : f32
    %71 = vector.broadcast %cst_26 : f32 to vector<8x256xf32>
    %72 = arith.addf %71, %70 : vector<8x256xf32>
    %73 = arith.subf %72, %66 : vector<8x256xf32>
    %74 = math.log %64 : vector<8x256xf32>
    %75 = arith.addf %73, %74 : vector<8x256xf32>
    %cst_27 = arith.constant 1.000000e+00 : f32
    %76 = vector.broadcast %cst_27 : f32 to vector<8x256xf32>
    %77 = arith.subf %8, %76 : vector<8x256xf32>
    %78 = math.log %6 : vector<8x256xf32>
    %79 = arith.mulf %77, %78 : vector<8x256xf32>
    %80 = arith.subf %75, %79 : vector<8x256xf32>
    %81 = arith.addf %80, %6 : vector<8x256xf32>
    %c8_i32 = arith.constant 8 : i32
    %82 = arith.muli %arg1, %c8_i32 : i32
    %83 = tpu.iota {dimensions = array<i32: 0>} : vector<8x256xi32>
    %84 = vector.broadcast %82 : i32 to vector<8x256xi32>
    %85 = arith.addi %84, %83 : vector<8x256xi32>
    %c256_i32 = arith.constant 256 : i32
    %86 = arith.muli %arg0, %c256_i32 : i32
    %87 = tpu.iota {dimensions = array<i32: 1>} : vector<8x256xi32>
    %88 = vector.broadcast %86 : i32 to vector<8x256xi32>
    %89 = arith.addi %88, %87 : vector<8x256xi32>
    %c256_i32_28 = arith.constant 256 : i32
    %90 = vector.broadcast %c256_i32_28 : i32 to vector<8x256xi32>
    %91 = arith.muli %85, %90 : vector<8x256xi32>
    %92 = arith.addi %91, %89 : vector<8x256xi32>
    %c256_i32_29 = arith.constant 256 : i32
    %93 = vector.broadcast %c256_i32_29 : i32 to vector<8x256xi32>
    %94 = arith.cmpi slt, %92, %93 : vector<8x256xi32>
    %cst_30 = arith.constant 0.000000e+00 : f32
    %95 = vector.broadcast %cst_30 : f32 to vector<8x256xf32>
    %96 = arith.select %94, %81, %95 : vector<8x256xi1>, vector<8x256xf32>
    %c0_31 = arith.constant 0 : index
    %c0_32 = arith.constant 0 : index
    %97 = vector.load %arg4[%c0_31, %c0_32] : memref<8x256xf32, #tpu.memory_space<vmem>>, vector<8x256xf32>
    %98 = arith.addf %97, %96 : vector<8x256xf32>
    %c0_33 = arith.constant 0 : index
    %c0_34 = arith.constant 0 : index
    %99 = vector.load %arg4[%c0_33, %c0_34] : memref<8x256xf32, #tpu.memory_space<vmem>>, vector<8x256xf32>
    tpu.vector_store %arg4[%c0_33, %c0_34], %98 {strides = array<i32>} : memref<8x256xf32, #tpu.memory_space<vmem>>, vector<8x256xf32>,
    return
  }
  func.func @transform_0(%arg0: i32, %arg1: i32) -> (i32, i32) {
    %c0_i32 = arith.constant 0 : i32
    return %arg1, %arg0 : i32, i32
  }
  func.func @transform_1(%arg0: i32, %arg1: i32) -> (i32, i32) {
    %c0_i32 = arith.constant 0 : i32
    return %arg1, %arg0 : i32, i32
  }
  func.func @transform_2(%arg0: i32, %arg1: i32) -> (i32, i32) {
    %c0_i32 = arith.constant 0 : i32
    %c0_i32_0 = arith.constant 0 : i32
    return %c0_i32, %arg0 : i32, i32
  }
}

</mosaic_0001>

<llo_original>
// kernel: tpu_custom_call.1
$region0: #{tpu_custom_call.1}
  #allocation0 [shape = 'u32[]', space=smem, size = 0x4, offset = 0x4, fixed_abs, tag = 'smem constant byte address 0x4 - core index']
  #allocation1 [shape = 'u32[72,128]{1,0:T(1,128)}', space=vmem, size = 0x9000, scoped, tag = 'internal scratch']
  %s0 = inlined_call_operand.hbm [shape: f32[8,256], index: 0, kind: input, shape index: {}]
  %s1 = inlined_call_operand.hbm [shape: f32[8,256], index: 1, kind: input, shape index: {}]
  %s2 = inlined_call_operand.hbm [shape: f32[8,256], index: 2, kind: output, shape index: {}]
  %s3 = sld [smem:[#allocation0]]
  $region30: #{tpu_custom_call.1} parent=0
    _
  %s5 = ssub.s32 1, %s3
  %s6 = scalar_select 0, %s5, %s3
  $region1: #{tpu_custom_call.1} parent=0
    #allocation2 [shape = 'u8[8192]{0}', space=vmem, size = 0x2000, scoped, tag = 'input window, operand 0, single buffered']
    #allocation3 [shape = 's32[1]{0}', space=sflag, size = 0x4, scoped, tag = 'scoped memory for tpu_custom_call.1']
    #allocation4 [shape = 's32[1]{0}', space=sflag, size = 0x4, scoped, tag = 'scoped memory for tpu_custom_call.1']
    #allocation5 [shape = 'u8[8192]{0}', space=vmem, size = 0x2000, scoped, tag = 'input window, operand 1, single buffered']
    #allocation6 [shape = 's32[1]{0}', space=sflag, size = 0x4, scoped, tag = 'scoped memory for tpu_custom_call.1']
    #allocation7 [shape = 'u8[8192]{0}', space=vmem, size = 0x2000, scoped, tag = 'output window, operand 0, single buffered']
    %7 = vsyncpa [#allocation3], 0
    %8 = vsyncpa [#allocation6], 0
    %9 = vsyncpa [#allocation4], 0
    // Predicated region
    $region2: #{tpu_custom_call.1} parent=1 // pred_check
      _
    $region3: #{tpu_custom_call.1} parent=1 // pred_check_branch
      %11 = sbr.rel (0) target = $region5
    $region4: #{tpu_custom_call.1} parent=1 // pred_region
      %13 = vsyncadd [#allocation3], 0
      %s15 = sshll.u32 %s0, 4
      %s16 = int_to_ptr.hbm [resolvable:$true] %s15
      %s17 = sshll.u32 [#allocation2], 4
      %s18 = int_to_ptr.vmem [resolvable:$true] %s17
      %20 = dma.hbm_to_vmem [thread:$0]  %s16, 256, %s18, [#allocation3]
    $region5: #{tpu_custom_call.1} parent=1 // pred_fallthru
      _
    // Predicated region
    $region6: #{tpu_custom_call.1} parent=1 // pred_check
      _
    $region7: #{tpu_custom_call.1} parent=1 // pred_check_branch
      %22 = sbr.rel (0) target = $region9
    $region8: #{tpu_custom_call.1} parent=1 // pred_region
      %24 = vsyncadd [#allocation6], 0
      %s26 = sshll.u32 %s1, 4
      %s27 = int_to_ptr.hbm [resolvable:$true] %s26
      %s28 = sshll.u32 [#allocation5], 4
      %s29 = int_to_ptr.vmem [resolvable:$true] %s28
      %31 = dma.hbm_to_vmem [thread:$0]  %s27, 256, %s29, [#allocation6]
    $region9: #{tpu_custom_call.1} parent=1 // pred_fallthru
      _
    // Predicated region
    $region10: #{tpu_custom_call.1} parent=1 // pred_check
      _
    $region11: #{tpu_custom_call.1} parent=1 // pred_check_branch
      %33 = sbr.rel (0) target = $region13
    $region12: #{tpu_custom_call.1} parent=1 // pred_region
      %35 = dma.done [#allocation3], 256
    $region13: #{tpu_custom_call.1} parent=1 // pred_fallthru
      _
    // Predicated region
    $region14: #{tpu_custom_call.1} parent=1 // pred_check
      _
    $region15: #{tpu_custom_call.1} parent=1 // pred_check_branch
      %37 = sbr.rel (0) target = $region17
    $region16: #{tpu_custom_call.1} parent=1 // pred_region
      %39 = dma.done [#allocation6], 256
    $region17: #{tpu_custom_call.1} parent=1 // pred_fallthru
      _
    %p40 = scmp.eq.s32.totalorder 0, 0
    // Predicated region
    $region18: #{tpu_custom_call.1} parent=1 // pred_check
      %p41 = pneg %p40
    $region19: #{tpu_custom_call.1} parent=1 // pred_check_branch
      %43 = sbr.rel (%p41) target = $region21
    $region20: #{tpu_custom_call.1} parent=1 // pred_region
      %44 = vst [vmem:[#allocation7] sm:$0xff] 0.0
      %45 = vst [vmem:[#allocation7 + $0x8] sm:$0xff] 0.0
    $region21: #{tpu_custom_call.1} parent=1 // pred_fallthru
      _
    %v46 = vld [vmem:[#allocation2] sm:$0xff]
    %v47 = vld [vmem:[#allocation2 + $0x8] sm:$0xff]
    %v48 = vld [vmem:[#allocation5] sm:$0xff]
    %v49 = vld [vmem:[#allocation5 + $0x8] sm:$0xff]
    %v50 = vadd.f32 %v48, 1e-12
    %v51 = vadd.f32 %v49, 1e-12
    %v52 = vadd.f32 %v46, 0.5
    %v53 = vadd.f32 %v47, 0.5
    %v54 = vadd.f32 %v52, 52.458332
    %v55 = vadd.f32 %v53, 52.458332
    %v56 = vadd.f32 %v52, 28.0
    %v57 = vadd.f32 %v53, 28.0
    %v58 = vmul.f32 %v54, %v52
    %v59 = vmul.f32 %v55, %v53
    %v60 = vadd.f32 %v58, 1203.8342
    %v61 = vadd.f32 %v59, 1203.8342
    %v62 = vmul.f32 %v56, %v52
    %v63 = vmul.f32 %v57, %v53
    %v64 = vadd.f32 %v62, 322.0
    %v65 = vadd.f32 %v63, 322.0
    %v66 = vmul.f32 %v60, %v52
    %v67 = vmul.f32 %v61, %v53
    %v68 = vadd.f32 %v66, 15784.881
    %v69 = vadd.f32 %v67, 15784.881
    %v70 = vmul.f32 %v64, %v52
    %v71 = vmul.f32 %v65, %v53
    %v72 = vadd.f32 %v70, 1960.0
    %v73 = vadd.f32 %v71, 1960.0
    %v74 = vmul.f32 %v68, %v52
    %v75 = vmul.f32 %v69, %v53
    %v76 = vadd.f32 %v74, 129347.26
    %v77 = vadd.f32 %v75, 129347.26
    %v78 = vmul.f32 %v72, %v52
    %v79 = vmul.f32 %v73, %v53
    %v80 = vadd.f32 %v78, 6769.0
    %v81 = vadd.f32 %v79, 6769.0
    %v82 = vmul.f32 %v76, %v52
    %v83 = vmul.f32 %v77, %v53
    %v84 = vadd.f32 %v82, 678289.7
    %v85 = vadd.f32 %v83, 678289.7
    %v86 = vmul.f32 %v80, %v52
    %v87 = vmul.f32 %v81, %v53
    %v88 = vadd.f32 %v86, 13132.0
    %v89 = vadd.f32 %v87, 13132.0
    %v90 = vmul.f32 %v84, %v52
    %v91 = vmul.f32 %v85, %v53
    %v92 = vadd.f32 %v90, 2222880.5
    %v93 = vadd.f32 %v91, 2222880.5
    %v94 = vmul.f32 %v88, %v52
    %v95 = vmul.f32 %v89, %v53
    %v96 = vadd.f32 %v94, 13068.0
    %v97 = vadd.f32 %v95, 13068.0
    %v98 = vmul.f32 %v92, %v52
    %v99 = vmul.f32 %v93, %v53
    %v100 = vadd.f32 %v98, 4162388.0
    %v101 = vadd.f32 %v99, 4162388.0
    %v102 = vmul.f32 %v96, %v52
    %v103 = vmul.f32 %v97, %v53
    %v104 = vadd.f32 %v102, 5040.0
    %v105 = vadd.f32 %v103, 5040.0
    %v106 = vmul.f32 %v100, %v52
    %v107 = vmul.f32 %v101, %v53
    %v108 = vadd.f32 %v106, 3409662.8
    %v109 = vadd.f32 %v107, 3409662.8
    %v110 = vmul.f32 %v104, %v52
    %v111 = vmul.f32 %v105, %v53
    %v112 = vadd.f32 %v110, 0.0
    %v113 = vadd.f32 %v111, 0.0
    %v114 = vrcp.pop %v112
    %v115 = vrcp.pop %v113
    %v116 = vmul.f32 %v112, %v114
    %v117 = vmul.f32 %v113, %v115
    %v118 = vsub.f32 2.0, %v116
    %v119 = vsub.f32 2.0, %v117
    %v120 = vmul.f32 %v114, %v118
    %v121 = vmul.f32 %v115, %v119
    %v122 = vmul.f32 %v108, %v120
    %v123 = vmul.f32 %v109, %v121
    %v124 = vadd.f32 %v52, 6.5
    %v125 = vadd.f32 %v53, 6.5
    %v126 = vsub.f32 %v52, 0.5
    %v127 = vsub.f32 %v53, 0.5
    %v128 = vlog2.pop %v124
    %v129 = vmul.f32 %v128, 0.6931472
    %v130 = vlog2.pop %v125
    %v131 = vmul.f32 %v130, 0.6931472
    %v132 = vmul.f32 %v126, %v129
    %v133 = vmul.f32 %v127, %v131
    %v134 = vadd.f32 %v132, 0.9189385
    %v135 = vadd.f32 %v133, 0.9189385
    %v136 = vsub.f32 %v134, %v124
    %v137 = vsub.f32 %v135, %v125
    %v138 = vlog2.pop %v122
    %v139 = vmul.f32 %v138, 0.6931472
    %v140 = vlog2.pop %v123
    %v141 = vmul.f32 %v140, 0.6931472
    %v142 = vadd.f32 %v136, %v139
    %v143 = vadd.f32 %v137, %v141
    %v144 = vsub.f32 %v52, 1.0
    %v145 = vsub.f32 %v53, 1.0
    %v146 = vlog2.pop %v50
    %v147 = vmul.f32 %v146, 0.6931472
    %v148 = vlog2.pop %v51
    %v149 = vmul.f32 %v148, 0.6931472
    %v150 = vmul.f32 %v144, %v147
    %v151 = vmul.f32 %v145, %v149
    %v152 = vsub.f32 %v142, %v150
    %v153 = vsub.f32 %v143, %v151
    %v154 = vadd.f32 %v152, %v50
    %v155 = vadd.f32 %v153, %v51
    %s156 = smul.u32 0, 8
    %v157 = vlaneseq
    %v158 = vshrl.u32 %v157, 7
    %v159 = vstv %s156
    %v160 = vadd.s32 %v159, %v158
    %s161 = smul.u32 0, 256
    %v162 = vlaneseq
    %v163 = vand.u32 %v162, 127
    %v164 = vadd.s32 %v163, 128
    %v165 = vstv %s161
    %v166 = vadd.s32 %v165, %v163
    %v167 = vadd.s32 %v165, %v164
    %v168 = vmul.u32 %v160, 256
    %v169 = vadd.s32 %v168, %v166
    %v170 = vadd.s32 %v168, %v167
    %vm171 = vcmp.lt.s32.totalorder %v169, 256
    %vm172 = vcmp.lt.s32.totalorder %v170, 256
    %v173 = vsel %vm171, %v154, 0.0
    %v174 = vsel %vm172, %v155, 0.0
    %v175 = vld [vmem:[#allocation7] sm:$0xff]
    %v176 = vld [vmem:[#allocation7 + $0x8] sm:$0xff]
    %v177 = vadd.f32 %v175, %v173
    %v178 = vadd.f32 %v176, %v174
    %179 = vst [vmem:[#allocation7] sm:$0xff] %v177
    %180 = vst [vmem:[#allocation7 + $0x8] sm:$0xff] %v178
    // Predicated region
    $region22: #{tpu_custom_call.1} parent=1 // pred_check
      _
    $region23: #{tpu_custom_call.1} parent=1 // pred_check_branch
      %182 = sbr.rel (0) target = $region25
    $region24: #{tpu_custom_call.1} parent=1 // pred_region
      %184 = vsyncadd [#allocation4], 0
      %s186 = sshll.u32 [#allocation7], 4
      %s187 = int_to_ptr.vmem [resolvable:$true] %s186
      %s188 = sshll.u32 %s2, 4
      %s189 = int_to_ptr.hbm [resolvable:$true] %s188
      %191 = dma.vmem_to_hbm [thread:$0]  %s187, 256, %s189, [#allocation4]
    $region25: #{tpu_custom_call.1} parent=1 // pred_fallthru
      _
    // Predicated region
    $region26: #{tpu_custom_call.1} parent=1 // pred_check
      _
    $region27: #{tpu_custom_call.1} parent=1 // pred_check_branch
      %193 = sbr.rel (0) target = $region29
    $region28: #{tpu_custom_call.1} parent=1 // pred_region
      %195 = dma.done [#allocation4], 256
    $region29: #{tpu_custom_call.1} parent=1 // pred_fallthru
      _
    %196 = vsyncpa [#allocation3], 1
    %197 = vsyncpa [#allocation6], 1
    %198 = vsyncpa [#allocation4], 1

</llo_original>
